<compile_context>
chip_gen: v7x
topology: tpu7x:2x2x1
jax: 0.10.0
libtpu: 0.0.40
codegen_flags: <defaults>
</compile_context>

<pallas_src>
import functools

import jax
import jax.numpy as jnp
from jax.experimental import pallas as pl
from jax.experimental.pallas import tpu as pltpu


def _round_up(a: int, b: int) -> int:
    return ((a + b - 1) // b) * b


# ---------------------------------------------------------------------------
# Fused kernel: raw matmul (bf16 MXU, f32 accumulate) + row/col sum-of-squares
# accumulated across the K grid axis + one broadcast scale on finalize.
#
# Per grid step:
#   x_ref  : (TM, TK)  raw input rows (native HBM dtype)
#   w_ref  : (TN, TK)  raw weight_v rows (native dtype, NOT transposed)
#   g_ref  : (1,  TN)  weight_g laid out lane-wise (0 in padded lanes)
#   o_ref  : (TM, TN)  output tile
#   acc_ref: (TM, TN) f32 ; xsq_ref: (TM, 1) f32 ; vsq_ref: (1, TN) f32
# Grid = (outer, inner, K) with K innermost ("arbitrary").
# ---------------------------------------------------------------------------
def _cosine_scores_kernel(x_ref, w_ref, g_ref, o_ref,
                          acc_ref, xsq_ref, vsq_ref, *, scale, mxu_dtype):
    k = pl.program_id(2)

    @pl.when(k == 0)
    def _init():
        acc_ref[...] = jnp.zeros_like(acc_ref)
        xsq_ref[...] = jnp.zeros_like(xsq_ref)
        vsq_ref[...] = jnp.zeros_like(vsq_ref)

    # MXU: contract the last (K) dim of both operands (no transposed weight
    # copy in HBM, no in-kernel transpose).  bf16 operands avoid the multi-pass
    # f32 MXU emulation; accumulation stays f32.
    acc_ref[...] += jax.lax.dot_general(
        x_ref[...].astype(mxu_dtype), w_ref[...].astype(mxu_dtype),
        (((1,), (1,)), ((), ())), preferred_element_type=jnp.float32)

    # Norm reductions kept in f32 for precision.  They are recomputed per
    # output tile, but run on VPU/XLU/EUP slots and hide under the MXU/DMA.
    xf = x_ref[...].astype(jnp.float32)                          # (TM, TK)
    wf = w_ref[...].astype(jnp.float32)                          # (TN, TK)
    xsq_ref[...] += jnp.sum(xf * xf, axis=1, keepdims=True)      # (TM, 1)

    # Column sum-of-squares produced directly lane-oriented as (1, TN) via a
    # tiny ones-matmul (avoids a (TN,1)->(1,TN) relayout).  Cost ~ TN*TK MACs
    # vs. the main matmul's TM*TN*TK -> negligible.
    ones_row = jnp.ones((1, wf.shape[1]), jnp.float32)
    vsq_ref[...] += jax.lax.dot_general(
        ones_row, wf * wf, (((1,), (1,)), ((), ())),
        preferred_element_type=jnp.float32)                      # (1, TN)

    @pl.when(k == pl.num_programs(2) - 1)
    def _finalize():
        d = jnp.sqrt(xsq_ref[...]) + 1e-5                        # (TM, 1)
        r = pl.reciprocal(d, approx=True)                        # EUP slot
        rowscale = r * (2.0 - d * r)                             # Newton refine
        g = g_ref[...].astype(jnp.float32)                       # (1, TN)
        # rsqrt on EUP; the max() guard keeps zero-padded classes finite (their
        # g is padded with 0, so those lanes come out exactly 0).  NOTE: a
        # genuine all-zero weight row yields 0 here instead of torch's NaN.
        colscale = (scale * g) * jax.lax.rsqrt(
            jnp.maximum(vsq_ref[...], jnp.float32(1e-30)))
        o_ref[...] = (acc_ref[...] * rowscale * colscale).astype(o_ref.dtype)


# ---------------------------------------------------------------------------
# Tile sizing: biggest lane-dense tiles that fit this chip's VMEM; K-tile
# (reduction grid axis) before shrinking the output tile.
# ---------------------------------------------------------------------------
def _pick_tiles(n, outdim, indim, x_bytes, w_bytes, g_bytes, out_bytes,
                mxu_bytes, budget, tm_max, tn_max):
    tm = min(tm_max, _round_up(n, 8))
    tn = min(tn_max, _round_up(outdim, 128))
    tk = _round_up(indim, 128)                       # try whole-K first

    def footprint(tm_, tn_, tk_):
        blocks = (tm_ * tk_ * x_bytes + tn_ * tk_ * w_bytes
                  + tn_ * g_bytes + tm_ * tn_ * out_bytes)        # double-buffered
        scratch = tm_ * tn_ * 4 + tm_ * 4 + tn_ * 4               # f32 accumulators
        temps = (tm_ * tk_ + tn_ * tk_) * (mxu_bytes + 4)         # bf16 casts + f32 upcasts
        return 2 * blocks + scratch + temps

    while footprint(tm, tn, tk) > budget:
        if tk > 512:                        # K-tile before shrinking output tile
            tk = max(512, _round_up(tk // 2, 128))
        elif tm > 256 and tm >= tn:
            tm = max(256, _round_up(tm // 2, 8))
        elif tn > 256:
            tn = max(256, _round_up(tn // 2, 128))
        elif tk > 128:
            tk = max(128, _round_up(tk // 2, 128))
        elif tm > 8:
            tm = max(8, _round_up(tm // 2, 8))
        elif tn > 128:
            tn = max(128, _round_up(tn // 2, 128))
        else:
            break                            # smallest legal tiles
    return tm, tn, tk


def cosine_dist_linear(x, weight_v, weight_g, *,
                       tm=512, tn=512, mxu_dtype=jnp.bfloat16):
    """scores = scale * (x / (||x||+1e-5)) @ (g * v / ||v||)^T.

    x: (N, indim), weight_v: (outdim, indim), weight_g: (outdim, 1) or (outdim,).
    """
    n, indim = x.shape
    outdim, indim_w = weight_v.shape
    assert indim_w == indim
    scale = 2.0 if outdim <= 200 else 10.0

    # Size tiles against this chip's VMEM (v5e/v6e: 128 MiB, v7x: 64 MiB/TC).
    try:
        vmem_cap = int(pltpu.get_tpu_info().vmem_capacity_bytes)
    except Exception:
        vmem_cap = 64 * 1024 * 1024                  # conservative (v7x) fallback
    budget = (vmem_cap * 5) // 8                     # sizing target w/ headroom
    vmem_limit = (vmem_cap * 3) // 4                 # scoped VMEM limit

    x_bytes = jnp.dtype(x.dtype).itemsize
    w_bytes = jnp.dtype(weight_v.dtype).itemsize
    g_bytes = jnp.dtype(weight_g.dtype).itemsize
    out_bytes = x_bytes
    mxu_bytes = jnp.dtype(mxu_dtype).itemsize

    TM, TN, TK = _pick_tiles(n, outdim, indim, x_bytes, w_bytes, g_bytes,
                             out_bytes, mxu_bytes, budget, tm, tn)

    n_pad = _round_up(n, TM)
    o_pad = _round_up(outdim, TN)
    k_pad = _round_up(indim, TK)
    num_i, num_j, num_k = n_pad // TM, o_pad // TN, k_pad // TK

    # Zero padding is benign everywhere: padded K columns add 0 to the matmul
    # and the sums-of-squares; padded x rows give a finite rowscale (1e5) and a
    # zero output row; padded classes have g == 0 -> colscale == 0 (no NaNs).
    x_p = x
    if (n_pad, k_pad) != (n, indim):
        x_p = jnp.pad(x, ((0, n_pad - n), (0, k_pad - indim)))
    w_p = weight_v
    if (o_pad, k_pad) != (outdim, indim):
        w_p = jnp.pad(weight_v, ((0, o_pad - outdim), (0, k_pad - indim)))
    g_row = jnp.reshape(weight_g, (1, outdim))
    if o_pad != outdim:
        g_row = jnp.pad(g_row, ((0, 0), (0, o_pad - outdim)))

    # Adaptive loop order (matters when num_k == 1, i.e. whole-K blocks): keep
    # the operand whose redundant re-reads would cost more HBM traffic resident
    # across the inner axis (its block index is then constant -> no re-DMA).
    x_traffic = (num_j - 1) * n_pad * k_pad * x_bytes   # x re-read once per j tile
    w_traffic = (num_i - 1) * o_pad * k_pad * w_bytes   # w re-read once per i tile
    if x_traffic <= w_traffic:
        grid = (num_j, num_i, num_k)                    # j outer: weight slab resident
        x_map = lambda j, i, k: (i, k)
        w_map = lambda j, i, k: (j, k)
        g_map = lambda j, i, k: (0, j)
        o_map = lambda j, i, k: (i, j)
    else:
        grid = (num_i, num_j, num_k)                    # i outer: x tile resident
        x_map = lambda i, j, k: (i, k)
        w_map = lambda i, j, k: (j, k)
        g_map = lambda i, j, k: (0, j)
        o_map = lambda i, j, k: (i, j)

    scores = pl.pallas_call(
        functools.partial(_cosine_scores_kernel, scale=scale, mxu_dtype=mxu_dtype),
        out_shape=jax.ShapeDtypeStruct((n_pad, o_pad), x.dtype),
        grid_spec=pltpu.PrefetchScalarGridSpec(
            num_scalar_prefetch=0,
            grid=grid,
            in_specs=[pl.BlockSpec((TM, TK), x_map),
                      pl.BlockSpec((TN, TK), w_map),
                      pl.BlockSpec((1, TN), g_map)],
            out_specs=pl.BlockSpec((TM, TN), o_map),
            scratch_shapes=[pltpu.VMEM((TM, TN), jnp.float32),
                            pltpu.VMEM((TM, 1), jnp.float32),
                            pltpu.VMEM((1, TN), jnp.float32)]),
        compiler_params=pltpu.CompilerParams(
            # Output-tile axes are independent ("parallel"; v7x megacore may
            # split them across its 2 TCs); K is a reduction ("arbitrary").
            dimension_semantics=("parallel", "parallel", "arbitrary"),
            vmem_limit_bytes=int(vmem_limit)),
    )(x_p, w_p, g_row)

    return scores[:n, :outdim]


def cosine_dist_linear_ref(x, weight_v, weight_g):
    scale = 2.0 if weight_v.shape[0] <= 200 else 10.0
    xn = x / (jnp.linalg.norm(x, axis=1, keepdims=True) + 1e-5)
    w = jnp.reshape(weight_g, (-1, 1)) * weight_v / jnp.linalg.norm(
        weight_v, axis=1, keepdims=True)
    return scale * (xn @ w.T)


if __name__ == "__main__":
    key = jax.random.PRNGKey(0)
    k_x, k_w = jax.random.split(key)

    N, indim, outdim = 8, 32, 16   # small shapes: batch N, Linear(indim, outdim)

    x = jax.random.normal(k_x, (N, indim), dtype=jnp.float32)

    # nn.Linear-style uniform init for v; WeightNorm initializes g to the
    # per-row norm of v, so the initial effective weight equals v.
    bound = 1.0 / (indim ** 0.5)
    weight_v = jax.random.uniform(k_w, (outdim, indim), dtype=jnp.float32,
                                  minval=-bound, maxval=bound)
    weight_g = jnp.linalg.norm(weight_v, axis=1, keepdims=True)   # (outdim, 1)

    out = jax.block_until_ready(cosine_dist_linear(x, weight_v, weight_g))
    ref = cosine_dist_linear_ref(x, weight_v, weight_g)

    assert out.shape == (N, outdim)
    # bf16 MXU operands (f32 accumulation + f32 norms) round at the ~1e-2 level
    # relative to the all-f32 reference.
    max_err = float(jnp.max(jnp.abs(out - ref)))
    assert jnp.allclose(out, ref, atol=2e-2, rtol=2e-2), max_err

    print("KERNEL_OK")
</pallas_src>

<mosaic_0001>
module attributes {stable_mosaic.version = 11 : i64} {
  func.func @_cosine_scores_kernel(%arg0: i32, %arg1: i32, %arg2: i32, %arg3: memref<8x128xf32, #tpu.memory_space<vmem>>, %arg4: memref<128x128xf32, #tpu.memory_space<vmem>>, %arg5: memref<1x128xf32, #tpu.memory_space<vmem>>, %arg6: memref<8x128xf32, #tpu.memory_space<vmem>>, %arg7: memref<8x128xf32, #tpu.memory_space<vmem>>, %arg8: memref<8x1xf32, #tpu.memory_space<vmem>>, %arg9: memref<1x128xf32, #tpu.memory_space<vmem>>) attributes {dimension_semantics = [#tpu.dimension_semantics<parallel>, #tpu.dimension_semantics<parallel>, #tpu.dimension_semantics<arbitrary>], iteration_bounds = array<i64: 1, 1, 1>, scalar_prefetch = 0 : i64, scratch_operands = 3 : i64, tpu.core_type = #tpu.core_type<tc>, window_params = [{transform_indices = @transform_0, window_bounds = array<i64: 8, 128>}, {transform_indices = @transform_1, window_bounds = array<i64: 128, 128>}, {transform_indices = @transform_2, window_bounds = array<i64: 1, 128>}, {transform_indices = @transform_3, window_bounds = array<i64: 8, 128>}]} {
    %c0_i32 = arith.constant 0 : i32
    %0 = arith.cmpi eq, %arg2, %c0_i32 : i32
    %1 = arith.extui %0 : i1 to i32
    %c0_i32_0 = arith.constant 0 : i32
    %2 = arith.cmpi ne, %1, %c0_i32_0 : i32
    scf.if %2 {
      %cst_25 = arith.constant 0.000000e+00 : f32
      %28 = vector.broadcast %cst_25 : f32 to vector<8x128xf32>
      %c0_26 = arith.constant 0 : index
      %c0_27 = arith.constant 0 : index
      %29 = vector.load %arg7[%c0_26, %c0_27] : memref<8x128xf32, #tpu.memory_space<vmem>>, vector<8x128xf32>
      tpu.vector_store %arg7[%c0_26, %c0_27], %28 {strides = array<i32>} : memref<8x128xf32, #tpu.memory_space<vmem>>, vector<8x128xf32>,
      %cst_28 = arith.constant 0.000000e+00 : f32
      %30 = vector.broadcast %cst_28 : f32 to vector<8x1xf32>
      %c0_29 = arith.constant 0 : index
      %c0_30 = arith.constant 0 : index
      %31 = vector.load %arg8[%c0_29, %c0_30] : memref<8x1xf32, #tpu.memory_space<vmem>>, vector<8x1xf32>
      tpu.vector_store %arg8[%c0_29, %c0_30], %30 {strides = array<i32>} : memref<8x1xf32, #tpu.memory_space<vmem>>, vector<8x1xf32>,
      %cst_31 = arith.constant 0.000000e+00 : f32
      %32 = vector.broadcast %cst_31 : f32 to vector<1x128xf32>
      %c0_32 = arith.constant 0 : index
      %c0_33 = arith.constant 0 : index
      %33 = vector.load %arg9[%c0_32, %c0_33] : memref<1x128xf32, #tpu.memory_space<vmem>>, vector<1x128xf32>
      tpu.vector_store %arg9[%c0_32, %c0_33], %32 {strides = array<i32>} : memref<1x128xf32, #tpu.memory_space<vmem>>, vector<1x128xf32>,
    } else {
    }
    %c0 = arith.constant 0 : index
    %c0_1 = arith.constant 0 : index
    %3 = vector.load %arg7[%c0, %c0_1] : memref<8x128xf32, #tpu.memory_space<vmem>>, vector<8x128xf32>
    %c0_2 = arith.constant 0 : index
    %c0_3 = arith.constant 0 : index
    %4 = vector.load %arg3[%c0_2, %c0_3] : memref<8x128xf32, #tpu.memory_space<vmem>>, vector<8x128xf32>
    %5 = arith.truncf %4 : vector<8x128xf32> to vector<8x128xbf16>
    %c0_4 = arith.constant 0 : index
    %c0_5 = arith.constant 0 : index
    %6 = vector.load %arg4[%c0_4, %c0_5] : memref<128x128xf32, #tpu.memory_space<vmem>>, vector<128x128xf32>
    %7 = arith.truncf %6 : vector<128x128xf32> to vector<128x128xbf16>
    %cst = arith.constant dense<0.000000e+00> : vector<8x128xf32>
    %8 = tpu.matmul %5, %7, %cst {dimension_numbers = #tpu.dot_dimension_numbers<[1], [1], [0], [0], [0, 0, 1, 0], [], []>} : vector<8x128xbf16>, vector<128x128xbf16>, vector<8x128xf32> -> vector<8x128xf32>
    %9 = arith.addf %3, %8 : vector<8x128xf32>
    %c0_6 = arith.constant 0 : index
    %c0_7 = arith.constant 0 : index
    %10 = vector.load %arg7[%c0_6, %c0_7] : memref<8x128xf32, #tpu.memory_space<vmem>>, vector<8x128xf32>
    tpu.vector_store %arg7[%c0_6, %c0_7], %9 {strides = array<i32>} : memref<8x128xf32, #tpu.memory_space<vmem>>, vector<8x128xf32>,
    %c0_8 = arith.constant 0 : index
    %c0_9 = arith.constant 0 : index
    %11 = vector.load %arg3[%c0_8, %c0_9] : memref<8x128xf32, #tpu.memory_space<vmem>>, vector<8x128xf32>
    %c0_10 = arith.constant 0 : index
    %c0_11 = arith.constant 0 : index
    %12 = vector.load %arg4[%c0_10, %c0_11] : memref<128x128xf32, #tpu.memory_space<vmem>>, vector<128x128xf32>
    %c0_12 = arith.constant 0 : index
    %c0_13 = arith.constant 0 : index
    %13 = vector.load %arg8[%c0_12, %c0_13] : memref<8x1xf32, #tpu.memory_space<vmem>>, vector<8x1xf32>
    %14 = arith.mulf %11, %11 : vector<8x128xf32>
    %cst_14 = arith.constant dense<0.000000e+00> : vector<8xf32>
    %15 = vector.multi_reduction <add>, %14, %cst_14 [1] : vector<8x128xf32> to vector<8xf32>
    %16 = vector.shape_cast %15 : vector<8xf32> to vector<8x1xf32>
    %17 = arith.addf %13, %16 : vector<8x1xf32>
    %c0_15 = arith.constant 0 : index
    %c0_16 = arith.constant 0 : index
    %18 = vector.load %arg8[%c0_15, %c0_16] : memref<8x1xf32, #tpu.memory_space<vmem>>, vector<8x1xf32>
    tpu.vector_store %arg8[%c0_15, %c0_16], %17 {strides = array<i32>} : memref<8x1xf32, #tpu.memory_space<vmem>>, vector<8x1xf32>,
    %cst_17 = arith.constant 1.000000e+00 : f32
    %19 = vector.broadcast %cst_17 : f32 to vector<1x128xf32>
    %c0_18 = arith.constant 0 : index
    %c0_19 = arith.constant 0 : index
    %20 = vector.load %arg9[%c0_18, %c0_19] : memref<1x128xf32, #tpu.memory_space<vmem>>, vector<1x128xf32>
    %21 = arith.mulf %12, %12 : vector<128x128xf32>
    %cst_20 = arith.constant dense<0.000000e+00> : vector<1x128xf32>
    %22 = tpu.matmul %19, %21, %cst_20 {dimension_numbers = #tpu.dot_dimension_numbers<[1], [1], [0], [0], [0, 0, 1, 0], [], []>} : vector<1x128xf32>, vector<128x128xf32>, vector<1x128xf32> -> vector<1x128xf32>
    %23 = arith.addf %20, %22 : vector<1x128xf32>
    %c0_21 = arith.constant 0 : index
    %c0_22 = arith.constant 0 : index
    %24 = vector.load %arg9[%c0_21, %c0_22] : memref<1x128xf32, #tpu.memory_space<vmem>>, vector<1x128xf32>
    tpu.vector_store %arg9[%c0_21, %c0_22], %23 {strides = array<i32>} : memref<1x128xf32, #tpu.memory_space<vmem>>, vector<1x128xf32>,
    %c0_i32_23 = arith.constant 0 : i32
    %25 = arith.cmpi eq, %arg2, %c0_i32_23 : i32
    %26 = arith.extui %25 : i1 to i32
    %c0_i32_24 = arith.constant 0 : i32
    %27 = arith.cmpi ne, %26, %c0_i32_24 : i32
    scf.if %27 {
      %c0_25 = arith.constant 0 : index
      %c0_26 = arith.constant 0 : index
      %28 = vector.load %arg8[%c0_25, %c0_26] : memref<8x1xf32, #tpu.memory_space<vmem>>, vector<8x1xf32>
      %29 = math.sqrt %28 : vector<8x1xf32>
      %cst_27 = arith.constant 9.99999974E-6 : f32
      %30 = vector.broadcast %cst_27 : f32 to vector<8x1xf32>
      %31 = arith.addf %29, %30 : vector<8x1xf32>
      %32 = tpu.reciprocal %31 {approx = true} : vector<8x1xf32> -> vector<8x1xf32>
      %33 = arith.mulf %31, %32 : vector<8x1xf32>
      %cst_28 = arith.constant 2.000000e+00 : f32
      %34 = vector.broadcast %cst_28 : f32 to vector<8x1xf32>
      %35 = arith.subf %34, %33 : vector<8x1xf32>
      %36 = arith.mulf %32, %35 : vector<8x1xf32>
      %c0_29 = arith.constant 0 : index
      %c0_30 = arith.constant 0 : index
      %37 = vector.load %arg5[%c0_29, %c0_30] : memref<1x128xf32, #tpu.memory_space<vmem>>, vector<1x128xf32>
      %cst_31 = arith.constant 2.000000e+00 : f32
      %38 = vector.broadcast %cst_31 : f32 to vector<1x128xf32>
      %39 = arith.mulf %38, %37 : vector<1x128xf32>
      %c0_32 = arith.constant 0 : index
      %c0_33 = arith.constant 0 : index
      %40 = vector.load %arg9[%c0_32, %c0_33] : memref<1x128xf32, #tpu.memory_space<vmem>>, vector<1x128xf32>
      %cst_34 = arith.constant 1.000000e-30 : f32
      %41 = vector.broadcast %cst_34 : f32 to vector<1x128xf32>
      %42 = arith.maximumf %40, %41 : vector<1x128xf32>
      %43 = math.rsqrt %42 : vector<1x128xf32>
      %44 = arith.mulf %39, %43 : vector<1x128xf32>
      %c0_35 = arith.constant 0 : index
      %c0_36 = arith.constant 0 : index
      %45 = vector.load %arg7[%c0_35, %c0_36] : memref<8x128xf32, #tpu.memory_space<vmem>>, vector<8x128xf32>
      %46 = vector.broadcast %36 : vector<8x1xf32> to vector<8x128xf32>
      %47 = arith.mulf %45, %46 : vector<8x128xf32>
      %48 = vector.broadcast %44 : vector<1x128xf32> to vector<8x128xf32>
      %49 = arith.mulf %47, %48 : vector<8x128xf32>
      %c0_37 = arith.constant 0 : index
      %c0_38 = arith.constant 0 : index
      %50 = vector.load %arg6[%c0_37, %c0_38] : memref<8x128xf32, #tpu.memory_space<vmem>>, vector<8x128xf32>
      tpu.vector_store %arg6[%c0_37, %c0_38], %49 {strides = array<i32>} : memref<8x128xf32, #tpu.memory_space<vmem>>, vector<8x128xf32>,
    } else {
    }
    return
  }
  func.func @transform_0(%arg0: i32, %arg1: i32, %arg2: i32) -> (i32, i32) {
    %c0_i32 = arith.constant 0 : i32
    return %arg1, %arg2 : i32, i32
  }
  func.func @transform_1(%arg0: i32, %arg1: i32, %arg2: i32) -> (i32, i32) {
    %c0_i32 = arith.constant 0 : i32
    return %arg0, %arg2 : i32, i32
  }
  func.func @transform_2(%arg0: i32, %arg1: i32, %arg2: i32) -> (i32, i32) {
    %c0_i32 = arith.constant 0 : i32
    %c0_i32_0 = arith.constant 0 : i32
    return %c0_i32, %arg0 : i32, i32
  }
  func.func @transform_3(%arg0: i32, %arg1: i32, %arg2: i32) -> (i32, i32) {
    %c0_i32 = arith.constant 0 : i32
    return %arg1, %arg0 : i32, i32
  }
}

</mosaic_0001>

<llo_original>
// kernel: tpu_custom_call.1
$region0: #{tpu_custom_call.1}
  #allocation0 [shape = 'u32[]', space=smem, size = 0x4, offset = 0x4, fixed_abs, tag = 'smem constant byte address 0x4 - core index']
  #allocation1 [shape = 'u32[144,128]{1,0:T(1,128)}', space=vmem, size = 0x12000, scoped, tag = 'internal scratch']
  #allocation2 [shape = 'f32[8,128]{1,0:T(8,128)}', space=vmem, size = 0x1000, scoped, tag = 'scratch operand']
  #allocation3 [shape = 'f32[8,1]{1,0:T(8,128)}', space=vmem, size = 0x1000, scoped, tag = 'scratch operand']
  #allocation4 [shape = 'f32[1,128]{1,0:T(1,128)}', space=vmem, size = 0x200, scoped, tag = 'scratch operand']
  %s0 = inlined_call_operand.hbm [shape: f32[8,128], index: 0, kind: input, shape index: {}]
  %s1 = inlined_call_operand.hbm [shape: f32[128,128], index: 1, kind: input, shape index: {}]
  %s2 = inlined_call_operand.vmem [shape: f32[1,128], index: 2, kind: input, shape index: {}]
  %s3 = inlined_call_operand.hbm [shape: f32[8,128], index: 3, kind: output, shape index: {}]
  %s4 = sld [smem:[#allocation0]]
  $region38: #{tpu_custom_call.1} parent=0
    _
  %s6 = ssub.s32 1, %s4
  %s7 = scalar_select 0, %s6, %s4
  $region1: #{tpu_custom_call.1} parent=0
    #allocation5 [shape = 'u8[4096]{0}', space=vmem, size = 0x1000, scoped, tag = 'input window, operand 0, single buffered']
    #allocation6 [shape = 's32[1]{0}', space=sflag, size = 0x4, scoped, tag = 'scoped memory for tpu_custom_call.1']
    #allocation7 [shape = 's32[1]{0}', space=sflag, size = 0x4, scoped, tag = 'scoped memory for tpu_custom_call.1']
    #allocation8 [shape = 'u8[65536]{0}', space=vmem, size = 0x10000, scoped, tag = 'input window, operand 1, single buffered']
    #allocation9 [shape = 's32[1]{0}', space=sflag, size = 0x4, scoped, tag = 'scoped memory for tpu_custom_call.1']
    #allocation10 [shape = 'u8[4096]{0}', space=vmem, size = 0x1000, scoped, tag = 'output window, operand 0, single buffered']
    %8 = vsyncpa [#allocation6], 0
    %9 = vsyncpa [#allocation9], 0
    %10 = vsyncpa [#allocation7], 0
    // Predicated region
    $region2: #{tpu_custom_call.1} parent=1 // pred_check
      _
    $region3: #{tpu_custom_call.1} parent=1 // pred_check_branch
      %12 = sbr.rel (0) target = $region5
    $region4: #{tpu_custom_call.1} parent=1 // pred_region
      %s14 = ssub.s32 128, 128
      %15 = vsyncadd [#allocation6], %s14
      %s17 = sshll.u32 [#allocation5], 4
      %s18 = int_to_ptr.vmem [resolvable:$true] %s17
      %20 = dma.hbm_to_vmem [thread:$0]  %s0, 128, %s18, [#allocation6]
    $region5: #{tpu_custom_call.1} parent=1 // pred_fallthru
      _
    // Predicated region
    $region6: #{tpu_custom_call.1} parent=1 // pred_check
      _
    $region7: #{tpu_custom_call.1} parent=1 // pred_check_branch
      %22 = sbr.rel (0) target = $region9
    $region8: #{tpu_custom_call.1} parent=1 // pred_region
      %s24 = ssub.s32 2048, 2048
      %25 = vsyncadd [#allocation9], %s24
      %s26 = sshll.u32 [#allocation8], 4
      %s27 = int_to_ptr.vmem [resolvable:$true] %s26
      %32 = dma.hbm_to_vmem [thread:$0]  %s1, 2048, %s27, [#allocation9], 128, 128, 8
    $region9: #{tpu_custom_call.1} parent=1 // pred_fallthru
      _
    // Predicated region
    $region10: #{tpu_custom_call.1} parent=1 // pred_check
      _
    $region11: #{tpu_custom_call.1} parent=1 // pred_check_branch
      %34 = sbr.rel (0) target = $region13
    $region12: #{tpu_custom_call.1} parent=1 // pred_region
      _
    $region13: #{tpu_custom_call.1} parent=1 // pred_fallthru
      _
    // Predicated region
    $region14: #{tpu_custom_call.1} parent=1 // pred_check
      _
    $region15: #{tpu_custom_call.1} parent=1 // pred_check_branch
      %36 = sbr.rel (0) target = $region17
    $region16: #{tpu_custom_call.1} parent=1 // pred_region
      %37 = dma.done [#allocation6], 128
    $region17: #{tpu_custom_call.1} parent=1 // pred_fallthru
      _
    // Predicated region
    $region18: #{tpu_custom_call.1} parent=1 // pred_check
      _
    $region19: #{tpu_custom_call.1} parent=1 // pred_check_branch
      %39 = sbr.rel (0) target = $region21
    $region20: #{tpu_custom_call.1} parent=1 // pred_region
      %40 = dma.done [#allocation9], 2048
    $region21: #{tpu_custom_call.1} parent=1 // pred_fallthru
      _
    %p42 = scmp.eq.s32.totalorder 0, 0
    // Predicated region
    $region22: #{tpu_custom_call.1} parent=1 // pred_check
      %p43 = pneg %p42
    $region23: #{tpu_custom_call.1} parent=1 // pred_check_branch
      %45 = sbr.rel (%p43) target = $region25
    $region24: #{tpu_custom_call.1} parent=1 // pred_region
      %46 = vst [vmem:[#allocation2] sm:$0xff] 0.0
      %vm47 = vcmask 7168
      %48 = vst.msk [vmem:[#allocation3] sm:$0xff] %vm47, 0.0
      %49 = vst [vmem:[#allocation4] sm:$0x1] 0.0
    $region25: #{tpu_custom_call.1} parent=1 // pred_fallthru
      _
    %v50 = vld [vmem:[#allocation2] sm:$0xff]
    %v51 = vld [vmem:[#allocation5] sm:$0xff]
    %v52 = vpack.c.bf16 %v51, %v51
    %v53 = vld [vmem:[#allocation8] sm:$0xff]
    %v54 = vld [vmem:[#allocation8 + $0x8] sm:$0xff]
    %v55 = vld [vmem:[#allocation8 + $0x10] sm:$0xff]
    %v56 = vld [vmem:[#allocation8 + $0x18] sm:$0xff]
    %v57 = vld [vmem:[#allocation8 + $0x20] sm:$0xff]
    %v58 = vld [vmem:[#allocation8 + $0x28] sm:$0xff]
    %v59 = vld [vmem:[#allocation8 + $0x30] sm:$0xff]
    %v60 = vld [vmem:[#allocation8 + $0x38] sm:$0xff]
    %v61 = vld [vmem:[#allocation8 + $0x40] sm:$0xff]
    %v62 = vld [vmem:[#allocation8 + $0x48] sm:$0xff]
    %v63 = vld [vmem:[#allocation8 + $0x50] sm:$0xff]
    %v64 = vld [vmem:[#allocation8 + $0x58] sm:$0xff]
    %v65 = vld [vmem:[#allocation8 + $0x60] sm:$0xff]
    %v66 = vld [vmem:[#allocation8 + $0x68] sm:$0xff]
    %v67 = vld [vmem:[#allocation8 + $0x70] sm:$0xff]
    %v68 = vld [vmem:[#allocation8 + $0x78] sm:$0xff]
    %v69 = vpack.c.bf16 %v54, %v53
    %v70 = vpack.c.bf16 %v56, %v55
    %v71 = vpack.c.bf16 %v58, %v57
    %v72 = vpack.c.bf16 %v60, %v59
    %v73 = vpack.c.bf16 %v62, %v61
    %v74 = vpack.c.bf16 %v64, %v63
    %v75 = vpack.c.bf16 %v66, %v65
    %v76 = vpack.c.bf16 %v68, %v67
    %77 = vmatprep.subr.bf16.mxu0 0
    %78 = vmatpush1.bf16.xpose.msra.mxu0 %v69
    %79 = vmatprep.subr.bf16.mxu0 0
    %80 = vmatpush1.bf16.xpose.msra.mxu0 %v70
    %81 = vmatprep.subr.bf16.mxu0 0
    %82 = vmatpush1.bf16.xpose.msra.mxu0 %v71
    %83 = vmatprep.subr.bf16.mxu0 0
    %84 = vmatpush1.bf16.xpose.msra.mxu0 %v72
    %85 = vmatprep.subr.bf16.mxu0 0
    %86 = vmatpush1.bf16.xpose.msra.mxu0 %v73
    %87 = vmatprep.subr.bf16.mxu0 0
    %88 = vmatpush1.bf16.xpose.msra.mxu0 %v74
    %89 = vmatprep.subr.bf16.mxu0 0
    %90 = vmatpush1.bf16.xpose.msra.mxu0 %v75
    %91 = vmatprep.subr.bf16.mxu0 0
    %92 = vmatpush1.bf16.xpose.msra.mxu0 %v76
    %93 = vmatprep.subr.bf16.mxu0 0
    %94 = vmatpush1.bf16.xpose.msra.mxu0 0
    %95 = vmatprep.subr.bf16.mxu0 0
    %96 = vmatpush1.bf16.xpose.msra.mxu0 0
    %97 = vmatprep.subr.bf16.mxu0 0
    %98 = vmatpush1.bf16.xpose.msra.mxu0 0
    %99 = vmatprep.subr.bf16.mxu0 0
    %100 = vmatpush1.bf16.xpose.msra.mxu0 0
    %101 = vmatprep.subr.bf16.mxu0 0
    %102 = vmatpush1.bf16.xpose.msra.mxu0 0
    %103 = vmatprep.subr.bf16.mxu0 0
    %104 = vmatpush1.bf16.xpose.msra.mxu0 0
    %105 = vmatprep.subr.bf16.mxu0 0
    %106 = vmatpush1.bf16.xpose.msra.mxu0 0
    %107 = vmatprep.subr.bf16.mxu0 0
    %108 = vmatpush1.bf16.xpose.msra.mxu0 0
    %109 = vmatprep.mubr.bf16.mxu0 0
    %110 = vmatmul.mubr.bf16.gmra.mrb[0].mxu0 %v52
    %v111 = vpop.f32.mrb[0].mxu0
    %v112 = vadd.f32 0.0, %v111
    %v113 = vpop.f32.mrb[0].mxu0
    %v114 = vpop.f32.mrb[0].mxu0
    %v115 = vpop.f32.mrb[0].mxu0
    %116 = vdwg.mxu0
    %v117 = vadd.f32 %v50, %v112
    %118 = vst [vmem:[#allocation2] sm:$0xff] %v117
    %v119 = vld [vmem:[#allocation5] sm:$0xff]
    %v120 = vld [vmem:[#allocation8] sm:$0xff]
    %v121 = vld [vmem:[#allocation8 + $0x8] sm:$0xff]
    %v122 = vld [vmem:[#allocation8 + $0x10] sm:$0xff]
    %v123 = vld [vmem:[#allocation8 + $0x18] sm:$0xff]
    %v124 = vld [vmem:[#allocation8 + $0x20] sm:$0xff]
    %v125 = vld [vmem:[#allocation8 + $0x28] sm:$0xff]
    %v126 = vld [vmem:[#allocation8 + $0x30] sm:$0xff]
    %v127 = vld [vmem:[#allocation8 + $0x38] sm:$0xff]
    %v128 = vld [vmem:[#allocation8 + $0x40] sm:$0xff]
    %v129 = vld [vmem:[#allocation8 + $0x48] sm:$0xff]
    %v130 = vld [vmem:[#allocation8 + $0x50] sm:$0xff]
    %v131 = vld [vmem:[#allocation8 + $0x58] sm:$0xff]
    %v132 = vld [vmem:[#allocation8 + $0x60] sm:$0xff]
    %v133 = vld [vmem:[#allocation8 + $0x68] sm:$0xff]
    %v134 = vld [vmem:[#allocation8 + $0x70] sm:$0xff]
    %v135 = vld [vmem:[#allocation8 + $0x78] sm:$0xff]
    %v136 = vld [vmem:[#allocation3] sm:$0xff]
    %v137 = vmul.f32 %v119, %v119
    %138 = vadd.xlane.f32.xlu0 %v137
    %v139 = vpop.xlane.xlu0 %138
    %v140 = vadd.f32 %v136, %v139
    %vm141 = vcmask 7168
    %142 = vst.msk [vmem:[#allocation3] sm:$0xff] %vm141, %v140
    %v143 = vld [vmem:[#allocation4] sm:$0x1]
    %v144 = vmul.f32 %v120, %v120
    %v145 = vmul.f32 %v121, %v121
    %v146 = vmul.f32 %v122, %v122
    %v147 = vmul.f32 %v123, %v123
    %v148 = vmul.f32 %v124, %v124
    %v149 = vmul.f32 %v125, %v125
    %v150 = vmul.f32 %v126, %v126
    %v151 = vmul.f32 %v127, %v127
    %v152 = vmul.f32 %v128, %v128
    %v153 = vmul.f32 %v129, %v129
    %v154 = vmul.f32 %v130, %v130
    %v155 = vmul.f32 %v131, %v131
    %v156 = vmul.f32 %v132, %v132
    %v157 = vmul.f32 %v133, %v133
    %v158 = vmul.f32 %v134, %v134
    %v159 = vmul.f32 %v135, %v135
    %160 = vmatprep.subr.mxu0 0.0
    %161 = vmatpush1.xpose.msra.mxu0 %v144
    %162 = vmatprep.subr.mxu0 0.0
    %163 = vmatpush1.xpose.msra.mxu0 %v145
    %164 = vmatprep.subr.mxu0 0.0
    %165 = vmatpush1.xpose.msra.mxu0 %v146
    %166 = vmatprep.subr.mxu0 0.0
    %167 = vmatpush1.xpose.msra.mxu0 %v147
    %168 = vmatprep.subr.mxu0 0.0
    %169 = vmatpush1.xpose.msra.mxu0 %v148
    %170 = vmatprep.subr.mxu0 0.0
    %171 = vmatpush1.xpose.msra.mxu0 %v149
    %172 = vmatprep.subr.mxu0 0.0
    %173 = vmatpush1.xpose.msra.mxu0 %v150
    %174 = vmatprep.subr.mxu0 0.0
    %175 = vmatpush1.xpose.msra.mxu0 %v151
    %176 = vmatprep.subr.mxu0 0.0
    %177 = vmatpush1.xpose.msra.mxu0 %v152
    %178 = vmatprep.subr.mxu0 0.0
    %179 = vmatpush1.xpose.msra.mxu0 %v153
    %180 = vmatprep.subr.mxu0 0.0
    %181 = vmatpush1.xpose.msra.mxu0 %v154
    %182 = vmatprep.subr.mxu0 0.0
    %183 = vmatpush1.xpose.msra.mxu0 %v155
    %184 = vmatprep.subr.mxu0 0.0
    %185 = vmatpush1.xpose.msra.mxu0 %v156
    %186 = vmatprep.subr.mxu0 0.0
    %187 = vmatpush1.xpose.msra.mxu0 %v157
    %188 = vmatprep.subr.mxu0 0.0
    %189 = vmatpush1.xpose.msra.mxu0 %v158
    %190 = vmatprep.subr.mxu0 0.0
    %191 = vmatpush1.xpose.msra.mxu0 %v159
    %192 = vmatprep.subr.mxu0 0.0
    %193 = vmatpush1.xpose.msra.mxu0 0.0
    %194 = vmatprep.subr.mxu0 0.0
    %195 = vmatpush1.xpose.msra.mxu0 0.0
    %196 = vmatprep.subr.mxu0 0.0
    %197 = vmatpush1.xpose.msra.mxu0 0.0
    %198 = vmatprep.subr.mxu0 0.0
    %199 = vmatpush1.xpose.msra.mxu0 0.0
    %200 = vmatprep.subr.mxu0 0.0
    %201 = vmatpush1.xpose.msra.mxu0 0.0
    %202 = vmatprep.subr.mxu0 0.0
    %203 = vmatpush1.xpose.msra.mxu0 0.0
    %204 = vmatprep.subr.mxu0 0.0
    %205 = vmatpush1.xpose.msra.mxu0 0.0
    %206 = vmatprep.subr.mxu0 0.0
    %207 = vmatpush1.xpose.msra.mxu0 0.0
    %208 = vmatprep.subr.mxu0 0.0
    %209 = vmatpush1.xpose.msra.mxu0 0.0
    %210 = vmatprep.subr.mxu0 0.0
    %211 = vmatpush1.xpose.msra.mxu0 0.0
    %212 = vmatprep.subr.mxu0 0.0
    %213 = vmatpush1.xpose.msra.mxu0 0.0
    %214 = vmatprep.subr.mxu0 0.0
    %215 = vmatpush1.xpose.msra.mxu0 0.0
    %216 = vmatprep.subr.mxu0 0.0
    %217 = vmatpush1.xpose.msra.mxu0 0.0
    %218 = vmatprep.subr.mxu0 0.0
    %219 = vmatpush1.xpose.msra.mxu0 0.0
    %220 = vmatprep.subr.mxu0 0.0
    %221 = vmatpush1.xpose.msra.mxu0 0.0
    %222 = vmatprep.subr.mxu0 0.0
    %223 = vmatpush1.xpose.msra.mxu0 0.0
    %224 = vmatprep.mubr.f32.mxu0 0.0
    %225 = vmatmul.mubr.f32.gmra.mrb[0].mxu0 1.0
    %v226 = vpop.f32.mrb[0].mxu0
    %v227 = vadd.f32 0.0, %v226
    %v228 = vpop.f32.mrb[0].mxu0
    %229 = vdwg.mxu0
    %v230 = vadd.f32 %v143, %v227
    %231 = vst [vmem:[#allocation4] sm:$0x1] %v230
    // Predicated region
    $region26: #{tpu_custom_call.1} parent=1 // pred_check
      %p232 = pneg %p42
    $region27: #{tpu_custom_call.1} parent=1 // pred_check_branch
      %234 = sbr.rel (%p232) target = $region29
    $region28: #{tpu_custom_call.1} parent=1 // pred_region
      %v235 = vld [vmem:[#allocation3] sm:$0xff]
      %v236 = vrsqrt.pop %v235
      %v237 = vmul.f32 %v235, %v236
      %vm238 = vcmp.eq.f32.partialorder %v235, inf
      %v239 = vsel %vm238, %v235, %v237
      %vm240 = vcmp.eq.f32.partialorder %v235, 0.0
      %v241 = vand.u32 %v235, 2147483648
      %v242 = vsel %vm240, %v241, %v239
      %v243 = vadd.f32 %v242, 1e-05
      %v244 = vrcp.pop %v243
      %v245 = vmul.f32 %v243, %v244
      %v246 = vsub.f32 2.0, %v245
      %v247 = vmul.f32 %v244, %v246
      %v248 = vld [vmem:[%s2] sm:$0x1]
      %v249 = vmul.f32 %v248, 2.0
      %v250 = vld [vmem:[#allocation4] sm:$0x1]
      %v251 = vmax.f32 %v250, 1e-30
      %v252 = vrsqrt.pop %v251
      %v253 = vmul.f32 %v249, %v252
      %v254 = vld [vmem:[#allocation2] sm:$0xff]
      %256 = vset.pattern.permute.xlu0 0
      %257 = vperm.xlu0 %256, %v247
      %v258 = vpop.permute.xlu0 %257
      %v260 = vmul.f32 %v254, %v258
      %v262 = vlaneseq
      %v263 = vshrl.u32 %v262, 7
      %v264 = vsub.s32 0, %v263
      %v265 = vrot.slane %v253, %v264
      %v267 = vmul.f32 %v260, %v265
      %268 = vst [vmem:[#allocation10] sm:$0xff] %v267
    $region29: #{tpu_custom_call.1} parent=1 // pred_fallthru
      _
    // Predicated region
    $region30: #{tpu_custom_call.1} parent=1 // pred_check
      _
    $region31: #{tpu_custom_call.1} parent=1 // pred_check_branch
      %270 = sbr.rel (0) target = $region33
    $region32: #{tpu_custom_call.1} parent=1 // pred_region
      %s272 = ssub.s32 128, 128
      %273 = vsyncadd [#allocation7], %s272
      %s275 = sshll.u32 [#allocation10], 4
      %s276 = int_to_ptr.vmem [resolvable:$true] %s275
      %278 = dma.vmem_to_hbm [thread:$0]  %s276, 128, %s3, [#allocation7]
    $region33: #{tpu_custom_call.1} parent=1 // pred_fallthru
      _
    // Predicated region
    $region34: #{tpu_custom_call.1} parent=1 // pred_check
      _
    $region35: #{tpu_custom_call.1} parent=1 // pred_check_branch
      %280 = sbr.rel (0) target = $region37
    $region36: #{tpu_custom_call.1} parent=1 // pred_region
      %281 = dma.done [#allocation7], 128
    $region37: #{tpu_custom_call.1} parent=1 // pred_fallthru
      _
    %282 = vsyncpa [#allocation6], 1
    %283 = vsyncpa [#allocation9], 1
    %284 = vsyncpa [#allocation7], 1

</llo_original>
